<compile_context>
chip_gen: v5e
topology: v5e:2x2
jax: 0.10.0
libtpu: 0.0.40
codegen_flags: <defaults>
</compile_context>

<pallas_src>
import functools

import jax
import jax.numpy as jnp
from jax.experimental import pallas as pl
from jax.experimental.pallas import tpu as pltpu


def _round_up(a, b):
    return ((a + b - 1) // b) * b


def _dice_loss_kernel(x_ref, t_ref, o_ref, acc_i, acc_p, acc_t, *,
                      use_sigmoid, smooth, loss_weight):
    k = pl.program_id(0)

    @pl.when(k == 0)
    def _init():
        acc_i[...] = jnp.zeros_like(acc_i)
        acc_p[...] = jnp.zeros_like(acc_p)
        acc_t[...] = jnp.zeros_like(acc_t)

    x = x_ref[...]                      # (block_rows, lane) f32
    t = t_ref[...]
    p = jax.nn.sigmoid(x) if use_sigmoid else x

    # Chunked elementwise accumulation (4-wide VALU slots); the expensive
    # cross-lane/sublane reduce happens only once, in the epilogue below.
    acc_i[...] += p * t
    acc_p[...] += p
    acc_t[...] += t

    @pl.when(k == pl.num_programs(0) - 1)
    def _finalize():
        inter = jnp.sum(acc_i[...], keepdims=True)        # (1, 1)
        psum = jnp.sum(acc_p[...], keepdims=True)
        tsum = jnp.sum(acc_t[...], keepdims=True)
        dice = (2.0 * inter + smooth) / (psum + tsum + smooth)
        o_ref[...] = loss_weight * (1.0 - dice)


def dice_loss(inputs, targets, *, smooth=1e-5, use_sigmoid=True,
              loss_weight=1.0, lane=512, max_block_rows=256):
    """Dice loss over arbitrarily shaped inputs/targets. Returns a scalar."""
    total = int(inputs.size)
    x = inputs.reshape(-1).astype(jnp.float32)
    t = targets.reshape(-1).astype(jnp.float32)

    # Lane-dense 2D tiling of the flattened tensor: (rows, lane) with
    # lane a multiple of 128 and block_rows a multiple of 8.
    rows_needed = -(-total // lane)
    block_rows = min(max_block_rows, _round_up(max(rows_needed, 1), 8))
    rows = _round_up(max(rows_needed, 1), block_rows)
    padded_total = rows * lane
    pad = padded_total - total
    if pad:
        # Pad logits so sigmoid(pad) == 0 exactly; targets pad with 0 -> the
        # padded region contributes nothing to any of the three sums.
        pad_val = -1e30 if use_sigmoid else 0.0
        x = jnp.pad(x, (0, pad), constant_values=pad_val)
        t = jnp.pad(t, (0, pad), constant_values=0.0)
    x2 = x.reshape(rows, lane)
    t2 = t.reshape(rows, lane)

    grid = (rows // block_rows,)

    # VMEM budget: 2 streamed inputs x 2 pipeline buffers + 3 f32 accumulators
    # of one block each, plus headroom. Well under v5e's 16 MiB scoped default
    # and v7x's 64 MiB physical VMEM even at max_block_rows.
    block_bytes = block_rows * lane * 4
    vmem_limit = int(min(max(7 * block_bytes + (1 << 20), 8 << 20), 64 << 20))

    kernel = functools.partial(
        _dice_loss_kernel,
        use_sigmoid=bool(use_sigmoid),
        smooth=float(smooth),
        loss_weight=float(loss_weight),
    )

    out = pl.pallas_call(
        kernel,
        out_shape=jax.ShapeDtypeStruct((1, 1), jnp.float32),
        grid_spec=pltpu.PrefetchScalarGridSpec(
            num_scalar_prefetch=0,
            grid=grid,
            in_specs=[
                pl.BlockSpec((block_rows, lane), lambda k: (k, 0)),
                pl.BlockSpec((block_rows, lane), lambda k: (k, 0)),
            ],
            out_specs=pl.BlockSpec((1, 1), lambda k: (0, 0)),
            scratch_shapes=[
                pltpu.VMEM((block_rows, lane), jnp.float32),
                pltpu.VMEM((block_rows, lane), jnp.float32),
                pltpu.VMEM((block_rows, lane), jnp.float32),
            ],
        ),
        # Single global scalar reduction -> the one grid axis is a reduction
        # ("arbitrary"). A v7x 2-TC split would need a cross-core combine;
        # not worth it for a memory-bound scalar loss.
        compiler_params=pltpu.CompilerParams(
            dimension_semantics=("arbitrary",),
            vmem_limit_bytes=vmem_limit,
        ),
        cost_estimate=pl.CostEstimate(
            flops=4 * padded_total,
            transcendentals=padded_total if use_sigmoid else 0,
            bytes_accessed=2 * padded_total * 4 + 4,
        ),
    )(x2, t2)

    return out.reshape(())


if __name__ == "__main__":
    key = jax.random.PRNGKey(0)
    kx, kt = jax.random.split(key)

    shape = (2, 4, 16, 16)          # (N, C, H, W)
    logits = jax.random.normal(kx, shape, dtype=jnp.float32)
    targets = (jax.random.uniform(kt, shape) > 0.5).astype(jnp.float32)

    smooth = 1e-5
    loss = dice_loss(logits, targets, smooth=smooth,
                     use_sigmoid=True, loss_weight=1.0)
    jax.block_until_ready(loss)

    # Pure-JAX reference of DiceLoss.forward.
    p = jax.nn.sigmoid(logits).reshape(-1)
    tt = targets.reshape(-1)
    inter = jnp.sum(p * tt)
    dice = (2.0 * inter + smooth) / (jnp.sum(p) + jnp.sum(tt) + smooth)
    ref = 1.0 * (1.0 - dice)

    assert loss.shape == ()
    assert jnp.allclose(loss, ref, atol=1e-5, rtol=1e-5)

    print("KERNEL_OK")
</pallas_src>

<mosaic_0001>
module attributes {stable_mosaic.version = 11 : i64} {
  func.func @_dice_loss_kernel(%arg0: i32, %arg1: memref<8x512xf32, #tpu.memory_space<vmem>>, %arg2: memref<8x512xf32, #tpu.memory_space<vmem>>, %arg3: memref<1x1xf32, #tpu.memory_space<vmem>>, %arg4: memref<8x512xf32, #tpu.memory_space<vmem>>, %arg5: memref<8x512xf32, #tpu.memory_space<vmem>>, %arg6: memref<8x512xf32, #tpu.memory_space<vmem>>) attributes {dimension_semantics = [#tpu.dimension_semantics<arbitrary>], iteration_bounds = array<i64: 1>, scalar_prefetch = 0 : i64, scratch_operands = 3 : i64, tpu.core_type = #tpu.core_type<tc>, window_params = [{transform_indices = @transform_0, window_bounds = array<i64: 8, 512>}, {transform_indices = @transform_1, window_bounds = array<i64: 8, 512>}, {pipeline_mode = #tpu.pipeline_mode<synchronous>, transform_indices = @transform_2, window_bounds = array<i64: 1, 1>}]} {
    %c0_i32 = arith.constant 0 : i32
    %0 = arith.cmpi eq, %arg0, %c0_i32 : i32
    %1 = arith.extui %0 : i1 to i32
    %c0_i32_0 = arith.constant 0 : i32
    %2 = arith.cmpi ne, %1, %c0_i32_0 : i32
    scf.if %2 {
      %cst_18 = arith.constant 0.000000e+00 : f32
      %23 = vector.broadcast %cst_18 : f32 to vector<8x512xf32>
      %c0_19 = arith.constant 0 : index
      %c0_20 = arith.constant 0 : index
      %24 = vector.load %arg4[%c0_19, %c0_20] : memref<8x512xf32, #tpu.memory_space<vmem>>, vector<8x512xf32>
      tpu.vector_store %arg4[%c0_19, %c0_20], %23 {strides = array<i32>} : memref<8x512xf32, #tpu.memory_space<vmem>>, vector<8x512xf32>,
      %cst_21 = arith.constant 0.000000e+00 : f32
      %25 = vector.broadcast %cst_21 : f32 to vector<8x512xf32>
      %c0_22 = arith.constant 0 : index
      %c0_23 = arith.constant 0 : index
      %26 = vector.load %arg5[%c0_22, %c0_23] : memref<8x512xf32, #tpu.memory_space<vmem>>, vector<8x512xf32>
      tpu.vector_store %arg5[%c0_22, %c0_23], %25 {strides = array<i32>} : memref<8x512xf32, #tpu.memory_space<vmem>>, vector<8x512xf32>,
      %cst_24 = arith.constant 0.000000e+00 : f32
      %27 = vector.broadcast %cst_24 : f32 to vector<8x512xf32>
      %c0_25 = arith.constant 0 : index
      %c0_26 = arith.constant 0 : index
      %28 = vector.load %arg6[%c0_25, %c0_26] : memref<8x512xf32, #tpu.memory_space<vmem>>, vector<8x512xf32>
      tpu.vector_store %arg6[%c0_25, %c0_26], %27 {strides = array<i32>} : memref<8x512xf32, #tpu.memory_space<vmem>>, vector<8x512xf32>,
    } else {
    }
    %c0 = arith.constant 0 : index
    %c0_1 = arith.constant 0 : index
    %3 = vector.load %arg1[%c0, %c0_1] : memref<8x512xf32, #tpu.memory_space<vmem>>, vector<8x512xf32>
    %c0_2 = arith.constant 0 : index
    %c0_3 = arith.constant 0 : index
    %4 = vector.load %arg2[%c0_2, %c0_3] : memref<8x512xf32, #tpu.memory_space<vmem>>, vector<8x512xf32>
    %5 = arith.negf %3 : vector<8x512xf32>
    %6 = math.exp %5 : vector<8x512xf32>
    %cst = arith.constant 1.000000e+00 : f32
    %7 = vector.broadcast %cst : f32 to vector<8x512xf32>
    %8 = arith.addf %7, %6 : vector<8x512xf32>
    %9 = arith.divf %7, %8 : vector<8x512xf32>
    %c0_4 = arith.constant 0 : index
    %c0_5 = arith.constant 0 : index
    %10 = vector.load %arg4[%c0_4, %c0_5] : memref<8x512xf32, #tpu.memory_space<vmem>>, vector<8x512xf32>
    %11 = arith.mulf %9, %4 : vector<8x512xf32>
    %12 = arith.addf %10, %11 : vector<8x512xf32>
    %c0_6 = arith.constant 0 : index
    %c0_7 = arith.constant 0 : index
    %13 = vector.load %arg4[%c0_6, %c0_7] : memref<8x512xf32, #tpu.memory_space<vmem>>, vector<8x512xf32>
    tpu.vector_store %arg4[%c0_6, %c0_7], %12 {strides = array<i32>} : memref<8x512xf32, #tpu.memory_space<vmem>>, vector<8x512xf32>,
    %c0_8 = arith.constant 0 : index
    %c0_9 = arith.constant 0 : index
    %14 = vector.load %arg5[%c0_8, %c0_9] : memref<8x512xf32, #tpu.memory_space<vmem>>, vector<8x512xf32>
    %15 = arith.addf %14, %9 : vector<8x512xf32>
    %c0_10 = arith.constant 0 : index
    %c0_11 = arith.constant 0 : index
    %16 = vector.load %arg5[%c0_10, %c0_11] : memref<8x512xf32, #tpu.memory_space<vmem>>, vector<8x512xf32>
    tpu.vector_store %arg5[%c0_10, %c0_11], %15 {strides = array<i32>} : memref<8x512xf32, #tpu.memory_space<vmem>>, vector<8x512xf32>,
    %c0_12 = arith.constant 0 : index
    %c0_13 = arith.constant 0 : index
    %17 = vector.load %arg6[%c0_12, %c0_13] : memref<8x512xf32, #tpu.memory_space<vmem>>, vector<8x512xf32>
    %18 = arith.addf %17, %4 : vector<8x512xf32>
    %c0_14 = arith.constant 0 : index
    %c0_15 = arith.constant 0 : index
    %19 = vector.load %arg6[%c0_14, %c0_15] : memref<8x512xf32, #tpu.memory_space<vmem>>, vector<8x512xf32>
    tpu.vector_store %arg6[%c0_14, %c0_15], %18 {strides = array<i32>} : memref<8x512xf32, #tpu.memory_space<vmem>>, vector<8x512xf32>,
    %c0_i32_16 = arith.constant 0 : i32
    %20 = arith.cmpi eq, %arg0, %c0_i32_16 : i32
    %21 = arith.extui %20 : i1 to i32
    %c0_i32_17 = arith.constant 0 : i32
    %22 = arith.cmpi ne, %21, %c0_i32_17 : i32
    scf.if %22 {
      %c0_18 = arith.constant 0 : index
      %c0_19 = arith.constant 0 : index
      %23 = vector.load %arg4[%c0_18, %c0_19] : memref<8x512xf32, #tpu.memory_space<vmem>>, vector<8x512xf32>
      %24 = vector.shape_cast %23 : vector<8x512xf32> to vector<1x8x512xf32>
      %cst_20 = arith.constant dense<0.000000e+00> : vector<1xf32>
      %25 = vector.multi_reduction <add>, %24, %cst_20 [1, 2] : vector<1x8x512xf32> to vector<1xf32>
      %26 = vector.shape_cast %25 : vector<1xf32> to vector<1x1x1xf32>
      %27 = vector.extract %26[0, 0, 0] : f32 from vector<1x1x1xf32>
      %28 = vector.broadcast %27 : f32 to vector<1x1xf32>
      %c0_21 = arith.constant 0 : index
      %c0_22 = arith.constant 0 : index
      %29 = vector.load %arg5[%c0_21, %c0_22] : memref<8x512xf32, #tpu.memory_space<vmem>>, vector<8x512xf32>
      %30 = vector.shape_cast %29 : vector<8x512xf32> to vector<1x8x512xf32>
      %cst_23 = arith.constant dense<0.000000e+00> : vector<1xf32>
      %31 = vector.multi_reduction <add>, %30, %cst_23 [1, 2] : vector<1x8x512xf32> to vector<1xf32>
      %32 = vector.shape_cast %31 : vector<1xf32> to vector<1x1x1xf32>
      %33 = vector.extract %32[0, 0, 0] : f32 from vector<1x1x1xf32>
      %34 = vector.broadcast %33 : f32 to vector<1x1xf32>
      %c0_24 = arith.constant 0 : index
      %c0_25 = arith.constant 0 : index
      %35 = vector.load %arg6[%c0_24, %c0_25] : memref<8x512xf32, #tpu.memory_space<vmem>>, vector<8x512xf32>
      %36 = vector.shape_cast %35 : vector<8x512xf32> to vector<1x8x512xf32>
      %cst_26 = arith.constant dense<0.000000e+00> : vector<1xf32>
      %37 = vector.multi_reduction <add>, %36, %cst_26 [1, 2] : vector<1x8x512xf32> to vector<1xf32>
      %38 = vector.shape_cast %37 : vector<1xf32> to vector<1x1x1xf32>
      %39 = vector.extract %38[0, 0, 0] : f32 from vector<1x1x1xf32>
      %40 = vector.broadcast %39 : f32 to vector<1x1xf32>
      %cst_27 = arith.constant 2.000000e+00 : f32
      %41 = vector.broadcast %cst_27 : f32 to vector<1x1xf32>
      %42 = arith.mulf %41, %28 : vector<1x1xf32>
      %cst_28 = arith.constant 9.99999974E-6 : f32
      %43 = vector.broadcast %cst_28 : f32 to vector<1x1xf32>
      %44 = arith.addf %42, %43 : vector<1x1xf32>
      %45 = arith.addf %34, %40 : vector<1x1xf32>
      %cst_29 = arith.constant 9.99999974E-6 : f32
      %46 = vector.broadcast %cst_29 : f32 to vector<1x1xf32>
      %47 = arith.addf %45, %46 : vector<1x1xf32>
      %48 = arith.divf %44, %47 : vector<1x1xf32>
      %cst_30 = arith.constant 1.000000e+00 : f32
      %49 = vector.broadcast %cst_30 : f32 to vector<1x1xf32>
      %50 = arith.subf %49, %48 : vector<1x1xf32>
      %cst_31 = arith.constant 1.000000e+00 : f32
      %51 = vector.broadcast %cst_31 : f32 to vector<1x1xf32>
      %52 = arith.mulf %51, %50 : vector<1x1xf32>
      %c0_32 = arith.constant 0 : index
      %c0_33 = arith.constant 0 : index
      %53 = vector.load %arg3[%c0_32, %c0_33] : memref<1x1xf32, #tpu.memory_space<vmem>>, vector<1x1xf32>
      tpu.vector_store %arg3[%c0_32, %c0_33], %52 {strides = array<i32>} : memref<1x1xf32, #tpu.memory_space<vmem>>, vector<1x1xf32>,
    } else {
    }
    return
  }
  func.func @transform_0(%arg0: i32) -> (i32, i32) {
    %c0_i32 = arith.constant 0 : i32
    %c0_i32_0 = arith.constant 0 : i32
    return %arg0, %c0_i32 : i32, i32
  }
  func.func @transform_1(%arg0: i32) -> (i32, i32) {
    %c0_i32 = arith.constant 0 : i32
    %c0_i32_0 = arith.constant 0 : i32
    return %arg0, %c0_i32 : i32, i32
  }
  func.func @transform_2(%arg0: i32) -> (i32, i32) {
    %c0_i32 = arith.constant 0 : i32
    %c0_i32_0 = arith.constant 0 : i32
    %c0_i32_1 = arith.constant 0 : i32
    return %c0_i32, %c0_i32_0 : i32, i32
  }
}

</mosaic_0001>

<llo_original>
// kernel: tpu_custom_call.1
$region0: #{tpu_custom_call.1}
  #allocation0 [shape = 'u32[]', space=smem, size = 0x4, offset = 0x4, fixed_abs, tag = 'smem constant byte address 0x4 - core index']
  #allocation1 [shape = 'u32[72,128]{1,0:T(1,128)}', space=vmem, size = 0x9000, scoped, tag = 'internal scratch']
  #allocation2 [shape = 'f32[8,512]{1,0:T(8,128)}', space=vmem, size = 0x4000, scoped, tag = 'scratch operand']
  #allocation3 [shape = 'f32[8,512]{1,0:T(8,128)}', space=vmem, size = 0x4000, scoped, tag = 'scratch operand']
  #allocation4 [shape = 'f32[8,512]{1,0:T(8,128)}', space=vmem, size = 0x4000, scoped, tag = 'scratch operand']
  %s0 = inlined_call_operand.hbm [shape: f32[8,512], index: 0, kind: input, shape index: {}]
  %s1 = inlined_call_operand.hbm [shape: f32[8,512], index: 1, kind: input, shape index: {}]
  %s2 = inlined_call_operand.hbm [shape: f32[1,1], index: 2, kind: output, shape index: {}]
  %s3 = sld [smem:[#allocation0]]
  $region34: #{tpu_custom_call.1} parent=0
    _
  %s5 = ssub.s32 1, %s3
  %s6 = scalar_select 0, %s5, %s3
  $region1: #{tpu_custom_call.1} parent=0
    #allocation5 [shape = 'u8[16384]{0}', space=vmem, size = 0x4000, scoped, tag = 'input window, operand 0, single buffered']
    #allocation6 [shape = 's32[1]{0}', space=sflag, size = 0x4, scoped, tag = 'scoped memory for tpu_custom_call.1']
    #allocation7 [shape = 's32[1]{0}', space=sflag, size = 0x4, scoped, tag = 'scoped memory for tpu_custom_call.1']
    #allocation8 [shape = 'u8[16384]{0}', space=vmem, size = 0x4000, scoped, tag = 'input window, operand 1, single buffered']
    #allocation9 [shape = 's32[1]{0}', space=sflag, size = 0x4, scoped, tag = 'scoped memory for tpu_custom_call.1']
    #allocation10 [shape = 'u8[512]{0}', space=vmem, size = 0x400, scoped, tag = 'output window, operand 0, single buffered']
    %7 = vsyncpa [#allocation6], 0
    %8 = vsyncpa [#allocation9], 0
    %9 = vsyncpa [#allocation7], 0
    // Predicated region
    $region2: #{tpu_custom_call.1} parent=1 // pred_check
      _
    $region3: #{tpu_custom_call.1} parent=1 // pred_check_branch
      %11 = sbr.rel (0) target = $region5
    $region4: #{tpu_custom_call.1} parent=1 // pred_region
      %13 = vsyncadd [#allocation6], 0
      %s15 = sshll.u32 %s0, 4
      %s16 = int_to_ptr.hbm [resolvable:$true] %s15
      %s17 = sshll.u32 [#allocation5], 4
      %s18 = int_to_ptr.vmem [resolvable:$true] %s17
      %20 = dma.hbm_to_vmem [thread:$0]  %s16, 512, %s18, [#allocation6]
    $region5: #{tpu_custom_call.1} parent=1 // pred_fallthru
      _
    // Predicated region
    $region6: #{tpu_custom_call.1} parent=1 // pred_check
      _
    $region7: #{tpu_custom_call.1} parent=1 // pred_check_branch
      %22 = sbr.rel (0) target = $region9
    $region8: #{tpu_custom_call.1} parent=1 // pred_region
      %24 = vsyncadd [#allocation9], 0
      %s26 = sshll.u32 %s1, 4
      %s27 = int_to_ptr.hbm [resolvable:$true] %s26
      %s28 = sshll.u32 [#allocation8], 4
      %s29 = int_to_ptr.vmem [resolvable:$true] %s28
      %31 = dma.hbm_to_vmem [thread:$0]  %s27, 512, %s29, [#allocation9]
    $region9: #{tpu_custom_call.1} parent=1 // pred_fallthru
      _
    // Predicated region
    $region10: #{tpu_custom_call.1} parent=1 // pred_check
      _
    $region11: #{tpu_custom_call.1} parent=1 // pred_check_branch
      %33 = sbr.rel (0) target = $region13
    $region12: #{tpu_custom_call.1} parent=1 // pred_region
      %35 = dma.done [#allocation6], 512
    $region13: #{tpu_custom_call.1} parent=1 // pred_fallthru
      _
    // Predicated region
    $region14: #{tpu_custom_call.1} parent=1 // pred_check
      _
    $region15: #{tpu_custom_call.1} parent=1 // pred_check_branch
      %37 = sbr.rel (0) target = $region17
    $region16: #{tpu_custom_call.1} parent=1 // pred_region
      %39 = dma.done [#allocation9], 512
    $region17: #{tpu_custom_call.1} parent=1 // pred_fallthru
      _
    %p40 = scmp.eq.s32.totalorder 0, 0
    // Predicated region
    $region18: #{tpu_custom_call.1} parent=1 // pred_check
      %p41 = pneg %p40
    $region19: #{tpu_custom_call.1} parent=1 // pred_check_branch
      %43 = sbr.rel (%p41) target = $region21
    $region20: #{tpu_custom_call.1} parent=1 // pred_region
      %44 = vst [vmem:[#allocation2] sm:$0xff] 0.0
      %45 = vst [vmem:[#allocation2 + $0x8] sm:$0xff] 0.0
      %46 = vst [vmem:[#allocation2 + $0x10] sm:$0xff] 0.0
      %47 = vst [vmem:[#allocation2 + $0x18] sm:$0xff] 0.0
      %48 = vst [vmem:[#allocation3] sm:$0xff] 0.0
      %49 = vst [vmem:[#allocation3 + $0x8] sm:$0xff] 0.0
      %50 = vst [vmem:[#allocation3 + $0x10] sm:$0xff] 0.0
      %51 = vst [vmem:[#allocation3 + $0x18] sm:$0xff] 0.0
      %52 = vst [vmem:[#allocation4] sm:$0xff] 0.0
      %53 = vst [vmem:[#allocation4 + $0x8] sm:$0xff] 0.0
      %54 = vst [vmem:[#allocation4 + $0x10] sm:$0xff] 0.0
      %55 = vst [vmem:[#allocation4 + $0x18] sm:$0xff] 0.0
    $region21: #{tpu_custom_call.1} parent=1 // pred_fallthru
      _
    %v56 = vld [vmem:[#allocation5] sm:$0xff]
    %v57 = vld [vmem:[#allocation5 + $0x8] sm:$0xff]
    %v58 = vld [vmem:[#allocation5 + $0x10] sm:$0xff]
    %v59 = vld [vmem:[#allocation5 + $0x18] sm:$0xff]
    %v60 = vld [vmem:[#allocation8] sm:$0xff]
    %v61 = vld [vmem:[#allocation8 + $0x8] sm:$0xff]
    %v62 = vld [vmem:[#allocation8 + $0x10] sm:$0xff]
    %v63 = vld [vmem:[#allocation8 + $0x18] sm:$0xff]
    %v64 = vxor.u32 %v56, 2147483648
    %v65 = vxor.u32 %v57, 2147483648
    %v66 = vxor.u32 %v58, 2147483648
    %v67 = vxor.u32 %v59, 2147483648
    %v68 = vmul.f32 %v64, 1.442695
    %v69 = vpow.pop %v68
    %v70 = vmul.f32 %v65, 1.442695
    %v71 = vpow.pop %v70
    %v72 = vmul.f32 %v66, 1.442695
    %v73 = vpow.pop %v72
    %v74 = vmul.f32 %v67, 1.442695
    %v75 = vpow.pop %v74
    %v76 = vadd.f32 %v69, 1.0
    %v77 = vadd.f32 %v71, 1.0
    %v78 = vadd.f32 %v73, 1.0
    %v79 = vadd.f32 %v75, 1.0
    %v80 = vrcp.pop %v76
    %v81 = vmul.f32 %v76, %v80
    %v82 = vsub.f32 1.0, %v81
    %v83 = vmul.f32 %v80, %v82
    %v84 = vadd.f32 %v80, %v83
    %vm85 = vweird.f32 %v76
    %vm86 = vweird.f32 %v80
    %vm87 = vmor %vm85, %vm86
    %v88 = vsel %vm87, %v80, %v84
    %v89 = vand.u32 2147483647, %v76
    %vm90 = vcmp.eq.f32.partialorder %v89, 8.507059e+37
    %v91 = vand.u32 %v76, 2147483648
    %v92 = vor.u32 1.1754944e-38, %v91
    %v93 = vsel %vm90, %v92, %v88
    %v94 = vmul.f32 1.0, %v93
    %v95 = vrcp.pop %v77
    %v96 = vmul.f32 %v77, %v95
    %v97 = vsub.f32 1.0, %v96
    %v98 = vmul.f32 %v95, %v97
    %v99 = vadd.f32 %v95, %v98
    %vm100 = vweird.f32 %v77
    %vm101 = vweird.f32 %v95
    %vm102 = vmor %vm100, %vm101
    %v103 = vsel %vm102, %v95, %v99
    %v104 = vand.u32 2147483647, %v77
    %vm105 = vcmp.eq.f32.partialorder %v104, 8.507059e+37
    %v106 = vand.u32 %v77, 2147483648
    %v107 = vor.u32 1.1754944e-38, %v106
    %v108 = vsel %vm105, %v107, %v103
    %v109 = vmul.f32 1.0, %v108
    %v110 = vrcp.pop %v78
    %v111 = vmul.f32 %v78, %v110
    %v112 = vsub.f32 1.0, %v111
    %v113 = vmul.f32 %v110, %v112
    %v114 = vadd.f32 %v110, %v113
    %vm115 = vweird.f32 %v78
    %vm116 = vweird.f32 %v110
    %vm117 = vmor %vm115, %vm116
    %v118 = vsel %vm117, %v110, %v114
    %v119 = vand.u32 2147483647, %v78
    %vm120 = vcmp.eq.f32.partialorder %v119, 8.507059e+37
    %v121 = vand.u32 %v78, 2147483648
    %v122 = vor.u32 1.1754944e-38, %v121
    %v123 = vsel %vm120, %v122, %v118
    %v124 = vmul.f32 1.0, %v123
    %v125 = vrcp.pop %v79
    %v126 = vmul.f32 %v79, %v125
    %v127 = vsub.f32 1.0, %v126
    %v128 = vmul.f32 %v125, %v127
    %v129 = vadd.f32 %v125, %v128
    %vm130 = vweird.f32 %v79
    %vm131 = vweird.f32 %v125
    %vm132 = vmor %vm130, %vm131
    %v133 = vsel %vm132, %v125, %v129
    %v134 = vand.u32 2147483647, %v79
    %vm135 = vcmp.eq.f32.partialorder %v134, 8.507059e+37
    %v136 = vand.u32 %v79, 2147483648
    %v137 = vor.u32 1.1754944e-38, %v136
    %v138 = vsel %vm135, %v137, %v133
    %v139 = vmul.f32 1.0, %v138
    %v140 = vld [vmem:[#allocation2] sm:$0xff]
    %v141 = vld [vmem:[#allocation2 + $0x8] sm:$0xff]
    %v142 = vld [vmem:[#allocation2 + $0x10] sm:$0xff]
    %v143 = vld [vmem:[#allocation2 + $0x18] sm:$0xff]
    %v144 = vmul.f32 %v94, %v60
    %v145 = vmul.f32 %v109, %v61
    %v146 = vmul.f32 %v124, %v62
    %v147 = vmul.f32 %v139, %v63
    %v148 = vadd.f32 %v140, %v144
    %v149 = vadd.f32 %v141, %v145
    %v150 = vadd.f32 %v142, %v146
    %v151 = vadd.f32 %v143, %v147
    %152 = vst [vmem:[#allocation2] sm:$0xff] %v148
    %153 = vst [vmem:[#allocation2 + $0x8] sm:$0xff] %v149
    %154 = vst [vmem:[#allocation2 + $0x10] sm:$0xff] %v150
    %155 = vst [vmem:[#allocation2 + $0x18] sm:$0xff] %v151
    %v156 = vld [vmem:[#allocation3] sm:$0xff]
    %v157 = vld [vmem:[#allocation3 + $0x8] sm:$0xff]
    %v158 = vld [vmem:[#allocation3 + $0x10] sm:$0xff]
    %v159 = vld [vmem:[#allocation3 + $0x18] sm:$0xff]
    %v160 = vadd.f32 %v156, %v94
    %v161 = vadd.f32 %v157, %v109
    %v162 = vadd.f32 %v158, %v124
    %v163 = vadd.f32 %v159, %v139
    %164 = vst [vmem:[#allocation3] sm:$0xff] %v160
    %165 = vst [vmem:[#allocation3 + $0x8] sm:$0xff] %v161
    %166 = vst [vmem:[#allocation3 + $0x10] sm:$0xff] %v162
    %167 = vst [vmem:[#allocation3 + $0x18] sm:$0xff] %v163
    %v168 = vld [vmem:[#allocation4] sm:$0xff]
    %v169 = vld [vmem:[#allocation4 + $0x8] sm:$0xff]
    %v170 = vld [vmem:[#allocation4 + $0x10] sm:$0xff]
    %v171 = vld [vmem:[#allocation4 + $0x18] sm:$0xff]
    %v172 = vadd.f32 %v168, %v60
    %v173 = vadd.f32 %v169, %v61
    %v174 = vadd.f32 %v170, %v62
    %v175 = vadd.f32 %v171, %v63
    %176 = vst [vmem:[#allocation4] sm:$0xff] %v172
    %177 = vst [vmem:[#allocation4 + $0x8] sm:$0xff] %v173
    %178 = vst [vmem:[#allocation4 + $0x10] sm:$0xff] %v174
    %179 = vst [vmem:[#allocation4 + $0x18] sm:$0xff] %v175
    // Predicated region
    $region22: #{tpu_custom_call.1} parent=1 // pred_check
      %p180 = pneg %p40
    $region23: #{tpu_custom_call.1} parent=1 // pred_check_branch
      %182 = sbr.rel (%p180) target = $region25
    $region24: #{tpu_custom_call.1} parent=1 // pred_region
      %v183 = vld [vmem:[#allocation2] sm:$0xff]
      %v184 = vld [vmem:[#allocation2 + $0x8] sm:$0xff]
      %v185 = vld [vmem:[#allocation2 + $0x10] sm:$0xff]
      %v186 = vld [vmem:[#allocation2 + $0x18] sm:$0xff]
      %v187 = vadd.f32 %v183, %v184
      %v188 = vadd.f32 %v187, %v185
      %v189 = vadd.f32 %v188, %v186
      %190 = vadd.xlane.f32.xlu0 %v189
      %v191 = vpop.xlane.xlu0 %190
      %v192 = vrot.slane %v191, 4
      %v193 = vadd.f32 %v191, %v192
      %v194 = vrot.slane %v193, 2
      %v195 = vadd.f32 %v193, %v194
      %v196 = vrot.slane %v195, 1
      %v197 = vadd.f32 %v195, %v196
      %s198 = vtos %v197
      %v199 = vstv %s198
      %v200 = vld [vmem:[#allocation3] sm:$0xff]
      %v201 = vld [vmem:[#allocation3 + $0x8] sm:$0xff]
      %v202 = vld [vmem:[#allocation3 + $0x10] sm:$0xff]
      %v203 = vld [vmem:[#allocation3 + $0x18] sm:$0xff]
      %v204 = vadd.f32 %v200, %v201
      %v205 = vadd.f32 %v204, %v202
      %v206 = vadd.f32 %v205, %v203
      %207 = vadd.xlane.f32.xlu0 %v206
      %v208 = vpop.xlane.xlu0 %207
      %v209 = vrot.slane %v208, 4
      %v210 = vadd.f32 %v208, %v209
      %v211 = vrot.slane %v210, 2
      %v212 = vadd.f32 %v210, %v211
      %v213 = vrot.slane %v212, 1
      %v214 = vadd.f32 %v212, %v213
      %s215 = vtos %v214
      %v216 = vstv %s215
      %v217 = vld [vmem:[#allocation4] sm:$0xff]
      %v218 = vld [vmem:[#allocation4 + $0x8] sm:$0xff]
      %v219 = vld [vmem:[#allocation4 + $0x10] sm:$0xff]
      %v220 = vld [vmem:[#allocation4 + $0x18] sm:$0xff]
      %v221 = vadd.f32 %v217, %v218
      %v222 = vadd.f32 %v221, %v219
      %v223 = vadd.f32 %v222, %v220
      %224 = vadd.xlane.f32.xlu0 %v223
      %v225 = vpop.xlane.xlu0 %224
      %v226 = vrot.slane %v225, 4
      %v227 = vadd.f32 %v225, %v226
      %v228 = vrot.slane %v227, 2
      %v229 = vadd.f32 %v227, %v228
      %v230 = vrot.slane %v229, 1
      %v231 = vadd.f32 %v229, %v230
      %s232 = vtos %v231
      %v233 = vstv %s232
      %v234 = vmul.f32 %v199, 2.0
      %v235 = vadd.f32 %v234, 1e-05
      %v236 = vadd.f32 %v216, %v233
      %v237 = vadd.f32 %v236, 1e-05
      %v238 = vrcp.pop %v237
      %v239 = vmul.f32 %v237, %v238
      %v240 = vsub.f32 1.0, %v239
      %v241 = vmul.f32 %v238, %v240
      %v242 = vadd.f32 %v238, %v241
      %vm243 = vweird.f32 %v237
      %vm244 = vweird.f32 %v238
      %vm245 = vmor %vm243, %vm244
      %v246 = vsel %vm245, %v238, %v242
      %v247 = vand.u32 2147483647, %v237
      %vm248 = vcmp.eq.f32.partialorder %v247, 8.507059e+37
      %v249 = vand.u32 %v237, 2147483648
      %v250 = vor.u32 1.1754944e-38, %v249
      %v251 = vsel %vm248, %v250, %v246
      %v252 = vmul.f32 %v235, %v251
      %v253 = vsub.f32 1.0, %v252
      %vm254 = vcmask 0
      %255 = vst.msk [vmem:[#allocation10] sm:$0x1] %vm254, %v253
    $region25: #{tpu_custom_call.1} parent=1 // pred_fallthru
      _
    // Predicated region
    $region26: #{tpu_custom_call.1} parent=1 // pred_check
      _
    $region27: #{tpu_custom_call.1} parent=1 // pred_check_branch
      %257 = sbr.rel (0) target = $region29
    $region28: #{tpu_custom_call.1} parent=1 // pred_region
      %259 = vsyncadd [#allocation7], 0
      %s261 = sshll.u32 [#allocation10], 4
      %s262 = int_to_ptr.vmem [resolvable:$true] %s261
      %s263 = sshll.u32 %s2, 4
      %s264 = int_to_ptr.hbm [resolvable:$true] %s263
      %266 = dma.vmem_to_hbm [thread:$0]  %s262, 16, %s264, [#allocation7]
    $region29: #{tpu_custom_call.1} parent=1 // pred_fallthru
      _
    // Predicated region
    $region30: #{tpu_custom_call.1} parent=1 // pred_check
      _
    $region31: #{tpu_custom_call.1} parent=1 // pred_check_branch
      %268 = sbr.rel (0) target = $region33
    $region32: #{tpu_custom_call.1} parent=1 // pred_region
      %270 = dma.done [#allocation7], 16
    $region33: #{tpu_custom_call.1} parent=1 // pred_fallthru
      _
    %271 = vsyncpa [#allocation6], 1
    %272 = vsyncpa [#allocation9], 1
    %273 = vsyncpa [#allocation7], 1

</llo_original>
